<compile_context>
chip_gen: v5e
topology: v5e:2x2
jax: 0.10.0
libtpu: 0.0.40
codegen_flags: <defaults>
</compile_context>

<pallas_src>
import math
from functools import partial

import jax
import jax.numpy as jnp
from jax.experimental import pallas as pl
from jax.experimental.pallas import tpu as pltpu


def _get_pad(size: int, multiple: int):
    new_size = math.ceil(size / multiple) * multiple
    pad_size = new_size - size
    pad_left = pad_size // 2
    pad_right = pad_size - pad_left
    return pad_left, pad_right


def _round_up(x: int, m: int) -> int:
    return (x + m - 1) // m * m


def _center_pad_flat_kernel(
    x_ref, o_ref, *, h, w, pad_top, pad_bottom, pad_left, pad_right
):
    # x_ref: (Cb, H*W) lane-dense; o_ref: (Cb, H_pad*W_pad) lane-dense.
    cb = x_ref.shape[0]
    w_pad = w + pad_left + pad_right
    x = x_ref[...]

    if pad_left == 0 and pad_right == 0:
        # Only H padding: rows stay contiguous in flat layout, so the padded
        # plane is just zero slabs around the flat data. No reshape needed.
        parts = []
        if pad_top:
            parts.append(jnp.zeros((cb, pad_top * w), x.dtype))
        parts.append(x)
        if pad_bottom:
            parts.append(jnp.zeros((cb, pad_bottom * w), x.dtype))
        o_ref[...] = jnp.concatenate(parts, axis=1)
        return

    # General case: build the padded plane in registers, one full-tile store.
    x = x.reshape(cb, h, w)
    cols = []
    if pad_left:
        cols.append(jnp.zeros((cb, h, pad_left), x.dtype))
    cols.append(x)
    if pad_right:
        cols.append(jnp.zeros((cb, h, pad_right), x.dtype))
    x = jnp.concatenate(cols, axis=2)  # (cb, h, w_pad)

    rows = []
    if pad_top:
        rows.append(jnp.zeros((cb, pad_top, w_pad), x.dtype))
    rows.append(x)
    if pad_bottom:
        rows.append(jnp.zeros((cb, pad_bottom, w_pad), x.dtype))
    if len(rows) > 1:
        x = jnp.concatenate(rows, axis=1)  # (cb, h_pad, w_pad)

    h_pad = h + pad_top + pad_bottom
    o_ref[...] = x.reshape(cb, h_pad * w_pad)


def _choose_block_planes(
    num_planes: int,
    per_plane_vmem_bytes: int,
    target_step_bytes: int,
    target_steps: int,
    sublane: int,
) -> int:
    """Pick planes-per-step: fit the per-step VMEM budget, keep the pipeline
    several blocks deep, prefer sublane-aligned blocks, allow a partial last
    block (cdiv grid)."""
    total = num_planes * per_plane_vmem_bytes
    if total <= target_step_bytes:
        # Whole problem is tiny: one full-extent block, no pipelining needed.
        return num_planes
    cb_budget = max(1, target_step_bytes // max(per_plane_vmem_bytes, 1))
    cb_steps = max(1, -(-num_planes // target_steps))  # ceil(B / target_steps)
    cb = max(1, min(cb_budget, cb_steps, num_planes))
    if num_planes >= sublane and cb_budget >= sublane:
        cb = max(cb, sublane)
        cb = (cb // sublane) * sublane  # sublane-aligned blocks
    return min(cb, num_planes)


def center_padding(x: jax.Array, multiple: int) -> jax.Array:
    """Pallas implementation of CenterPadding.forward for NCHW inputs."""
    N, C, H, W = x.shape
    pad_top, pad_bottom = _get_pad(H, multiple)
    pad_left, pad_right = _get_pad(W, multiple)

    # Fast path: nothing to pad -> no kernel, no extra HBM traffic.
    if pad_top == pad_bottom == pad_left == pad_right == 0:
        return x

    H_pad = H + pad_top + pad_bottom
    W_pad = W + pad_left + pad_right
    B = N * C
    hw_in = H * W
    hw_out = H_pad * W_pad

    itemsize = jnp.dtype(x.dtype).itemsize
    sublane = max(8, (8 * 4) // max(itemsize, 1))  # f32: 8, bf16: 16, int8: 32
    lane = 128

    # Layout-aware per-plane footprint (lane-dense flat layout => lanes round
    # to 128, sublane rounding handled by keeping cb sublane-aligned).
    per_plane_vmem = (_round_up(hw_in, lane) + _round_up(hw_out, lane)) * itemsize

    target_step_bytes = 8 * 1024 * 1024  # in+out per step; x2 double-buffered
    target_steps = 8

    if per_plane_vmem > target_step_bytes:
        # TODO(synk): add an H-tiled Pallas path for very large planes instead
        # of falling back to XLA pad (avoids VMEM OOM, first hit on v7x 64MiB).
        return jnp.pad(
            x, ((0, 0), (0, 0), (pad_top, pad_bottom), (pad_left, pad_right))
        )

    cb = _choose_block_planes(B, per_plane_vmem, target_step_bytes, target_steps, sublane)
    grid = (pl.cdiv(B, cb),)

    # Contiguous (free) reshapes: collapse (N,C)->B and (H,W)->H*W so blocks
    # are lane-dense on both sides of the DMA.
    x_flat = x.reshape(B, hw_in)

    kernel = partial(
        _center_pad_flat_kernel,
        h=H,
        w=W,
        pad_top=pad_top,
        pad_bottom=pad_bottom,
        pad_left=pad_left,
        pad_right=pad_right,
    )

    bytes_accessed = (B * hw_in + B * hw_out) * itemsize

    out_flat = pl.pallas_call(
        kernel,
        out_shape=jax.ShapeDtypeStruct((B, hw_out), x.dtype),
        grid=grid,
        in_specs=[pl.BlockSpec((cb, hw_in), lambda i: (i, 0))],
        out_specs=pl.BlockSpec((cb, hw_out), lambda i: (i, 0)),
        compiler_params=pltpu.CompilerParams(
            dimension_semantics=("parallel",),
            vmem_limit_bytes=32 * 1024 * 1024,
        ),
        cost_estimate=pl.CostEstimate(
            flops=0, transcendentals=0, bytes_accessed=bytes_accessed
        ),
    )(x_flat)

    return out_flat.reshape(N, C, H_pad, W_pad)


if __name__ == "__main__":
    MULTIPLE = 14  # CenterPadding(multiple=14), e.g. ViT patch size

    key = jax.random.PRNGKey(0)

    # Main case: both H and W need centered padding (16 -> 28).
    x = jax.random.normal(key, (2, 4, 16, 16), dtype=jnp.float32)
    out = jax.block_until_ready(center_padding(x, MULTIPLE))
    pt, pb = _get_pad(x.shape[2], MULTIPLE)
    plft, prt = _get_pad(x.shape[3], MULTIPLE)
    ref = jnp.pad(x, ((0, 0), (0, 0), (pt, pb), (plft, prt)))
    assert out.shape == ref.shape, (out.shape, ref.shape)
    assert bool(jnp.allclose(out, ref)), "mismatch vs reference padding"

    # H-only padding case (W already a multiple of 14): flat no-reshape path.
    key2 = jax.random.PRNGKey(1)
    xh = jax.random.normal(key2, (1, 3, 20, 28), dtype=jnp.float32)
    outh = jax.block_until_ready(center_padding(xh, MULTIPLE))
    pt2, pb2 = _get_pad(20, MULTIPLE)
    refh = jnp.pad(xh, ((0, 0), (0, 0), (pt2, pb2), (0, 0)))
    assert outh.shape == refh.shape, (outh.shape, refh.shape)
    assert bool(jnp.allclose(outh, refh)), "mismatch vs reference (H-only pad)"

    # Fast path: already-aligned input is returned unchanged.
    x_aligned = jax.random.normal(key, (1, 2, 28, 28), dtype=jnp.float32)
    out_aligned = jax.block_until_ready(center_padding(x_aligned, MULTIPLE))
    assert out_aligned.shape == x_aligned.shape
    assert bool(jnp.allclose(out_aligned, x_aligned))

    print("KERNEL_OK")
</pallas_src>

<mosaic_0001>
module attributes {stable_mosaic.version = 11 : i64} {
  func.func @_center_pad_flat_kernel(%arg0: i32, %arg1: memref<8x256xf32, #tpu.memory_space<vmem>>, %arg2: memref<8x784xf32, #tpu.memory_space<vmem>>) attributes {dimension_semantics = [#tpu.dimension_semantics<parallel>], iteration_bounds = array<i64: 1>, scalar_prefetch = 0 : i64, scratch_operands = 0 : i64, tpu.core_type = #tpu.core_type<tc>, window_params = [{transform_indices = @transform_0, window_bounds = array<i64: 8, 256>}, {transform_indices = @transform_1, window_bounds = array<i64: 8, 784>}]} {
    %c0 = arith.constant 0 : index
    %c0_0 = arith.constant 0 : index
    %0 = vector.load %arg1[%c0, %c0_0] : memref<8x256xf32, #tpu.memory_space<vmem>>, vector<8x256xf32>
    %1 = vector.shape_cast %0 : vector<8x256xf32> to vector<8x16x16xf32>
    %cst = arith.constant 0.000000e+00 : f32
    %2 = vector.broadcast %cst : f32 to vector<8x16x6xf32>
    %cst_1 = arith.constant 0.000000e+00 : f32
    %3 = vector.broadcast %cst_1 : f32 to vector<8x16x6xf32>
    %4 = tpu.concatenate %2, %1, %3 in 2 : vector<8x16x6xf32>, vector<8x16x16xf32>, vector<8x16x6xf32> -> vector<8x16x28xf32>
    %cst_2 = arith.constant 0.000000e+00 : f32
    %5 = vector.broadcast %cst_2 : f32 to vector<8x6x28xf32>
    %cst_3 = arith.constant 0.000000e+00 : f32
    %6 = vector.broadcast %cst_3 : f32 to vector<8x6x28xf32>
    %7 = tpu.concatenate %5, %4, %6 in 1 : vector<8x6x28xf32>, vector<8x16x28xf32>, vector<8x6x28xf32> -> vector<8x28x28xf32>
    %8 = vector.shape_cast %7 : vector<8x28x28xf32> to vector<8x784xf32>
    %c0_4 = arith.constant 0 : index
    %c0_5 = arith.constant 0 : index
    %9 = vector.load %arg2[%c0_4, %c0_5] : memref<8x784xf32, #tpu.memory_space<vmem>>, vector<8x784xf32>
    tpu.vector_store %arg2[%c0_4, %c0_5], %8 {strides = array<i32>} : memref<8x784xf32, #tpu.memory_space<vmem>>, vector<8x784xf32>,
    return
  }
  func.func @transform_0(%arg0: i32) -> (i32, i32) {
    %c0_i32 = arith.constant 0 : i32
    %c0_i32_0 = arith.constant 0 : i32
    return %arg0, %c0_i32 : i32, i32
  }
  func.func @transform_1(%arg0: i32) -> (i32, i32) {
    %c0_i32 = arith.constant 0 : i32
    %c0_i32_0 = arith.constant 0 : i32
    return %arg0, %c0_i32 : i32, i32
  }
}

</mosaic_0001>

<llo_original>
// kernel: tpu_custom_call.1
$region0: #{tpu_custom_call.1}
  #allocation0 [shape = 'u32[]', space=smem, size = 0x4, offset = 0x4, fixed_abs, tag = 'smem constant byte address 0x4 - core index']
  #allocation1 [shape = 'u32[72,128]{1,0:T(1,128)}', space=vmem, size = 0x9000, scoped, tag = 'internal scratch']
  %s0 = inlined_call_operand.hbm [shape: f32[8,256], index: 0, kind: input, shape index: {}]
  %s1 = inlined_call_operand.hbm [shape: f32[8,784], index: 1, kind: output, shape index: {}]
  %s2 = sld [smem:[#allocation0]]
  $region18: #{tpu_custom_call.1} parent=0
    _
  %s4 = ssub.s32 1, %s2
  %s5 = scalar_select 0, %s4, %s2
  $region1: #{tpu_custom_call.1} parent=0
    #allocation2 [shape = 'u8[8192]{0}', space=vmem, size = 0x2000, scoped, tag = 'input window, operand 0, single buffered']
    #allocation3 [shape = 's32[1]{0}', space=sflag, size = 0x4, scoped, tag = 'scoped memory for tpu_custom_call.1']
    #allocation4 [shape = 's32[1]{0}', space=sflag, size = 0x4, scoped, tag = 'scoped memory for tpu_custom_call.1']
    #allocation5 [shape = 'u8[28672]{0}', space=vmem, size = 0x7000, scoped, tag = 'output window, operand 0, single buffered']
    %6 = vsyncpa [#allocation3], 0
    %7 = vsyncpa [#allocation4], 0
    // Predicated region
    $region2: #{tpu_custom_call.1} parent=1 // pred_check
      _
    $region3: #{tpu_custom_call.1} parent=1 // pred_check_branch
      %9 = sbr.rel (0) target = $region5
    $region4: #{tpu_custom_call.1} parent=1 // pred_region
      %11 = vsyncadd [#allocation3], 0
      %s13 = sshll.u32 %s0, 4
      %s14 = int_to_ptr.hbm [resolvable:$true] %s13
      %s15 = sshll.u32 [#allocation2], 4
      %s16 = int_to_ptr.vmem [resolvable:$true] %s15
      %18 = dma.hbm_to_vmem [thread:$0]  %s14, 256, %s16, [#allocation3]
    $region5: #{tpu_custom_call.1} parent=1 // pred_fallthru
      _
    // Predicated region
    $region6: #{tpu_custom_call.1} parent=1 // pred_check
      _
    $region7: #{tpu_custom_call.1} parent=1 // pred_check_branch
      %20 = sbr.rel (0) target = $region9
    $region8: #{tpu_custom_call.1} parent=1 // pred_region
      %22 = dma.done [#allocation3], 256
    $region9: #{tpu_custom_call.1} parent=1 // pred_fallthru
      _
    %v23 = vld [vmem:[#allocation2] sm:$0xff]
    %v24 = vld [vmem:[#allocation2 + $0x8] sm:$0xff]
    %26 = vrot.lane.b32.xlu0 %v23, 112
    %v27 = vpop.permute.xlu0 %26
    %29 = vrot.lane.b32.xlu0 %v23, 96
    %v30 = vpop.permute.xlu0 %29
    %32 = vrot.lane.b32.xlu0 %v23, 80
    %v33 = vpop.permute.xlu0 %32
    %35 = vrot.lane.b32.xlu0 %v23, 64
    %v36 = vpop.permute.xlu0 %35
    %38 = vrot.lane.b32.xlu0 %v23, 48
    %v39 = vpop.permute.xlu0 %38
    %41 = vrot.lane.b32.xlu0 %v23, 32
    %v42 = vpop.permute.xlu0 %41
    %44 = vrot.lane.b32.xlu0 %v23, 16
    %v45 = vpop.permute.xlu0 %44
    %48 = vrot.lane.b32.xlu0 %v24, 112
    %v49 = vpop.permute.xlu0 %48
    %51 = vrot.lane.b32.xlu0 %v24, 96
    %v52 = vpop.permute.xlu0 %51
    %54 = vrot.lane.b32.xlu0 %v24, 80
    %v55 = vpop.permute.xlu0 %54
    %57 = vrot.lane.b32.xlu0 %v24, 64
    %v58 = vpop.permute.xlu0 %57
    %60 = vrot.lane.b32.xlu0 %v24, 48
    %v61 = vpop.permute.xlu0 %60
    %63 = vrot.lane.b32.xlu0 %v24, 32
    %v64 = vpop.permute.xlu0 %63
    %66 = vrot.lane.b32.xlu0 %v24, 16
    %v67 = vpop.permute.xlu0 %66
    %v69 = vrot.slane %v30, 4
    %vm70 = vcmask 1047556
    %v71 = vsel %vm70, %v69, %v23
    %v72 = vrot.slane %v23, 4
    %v73 = vsel %vm70, %v30, %v72
    %v75 = vunpack.c.l.s4 1983009808
    %v76 = vunpack.c.0.s8 %v75
    %v77 = vperm.slane %v71, %v76
    %v79 = vunpack.c.l.s4 1983009808
    %v80 = vunpack.c.0.s8 %v79
    %v81 = vperm.slane %v73, %v80
    %v82 = vrot.slane %v33, 4
    %v83 = vsel %vm70, %v82, %v27
    %v84 = vrot.slane %v27, 4
    %v85 = vsel %vm70, %v33, %v84
    %v87 = vunpack.c.l.s4 1983009808
    %v88 = vunpack.c.0.s8 %v87
    %v89 = vperm.slane %v83, %v88
    %v91 = vunpack.c.l.s4 1983009808
    %v92 = vunpack.c.0.s8 %v91
    %v93 = vperm.slane %v85, %v92
    %v94 = vrot.slane %v42, 4
    %v95 = vsel %vm70, %v94, %v36
    %v96 = vrot.slane %v36, 4
    %v97 = vsel %vm70, %v42, %v96
    %v99 = vunpack.c.l.s4 1983009808
    %v100 = vunpack.c.0.s8 %v99
    %v101 = vperm.slane %v95, %v100
    %v103 = vunpack.c.l.s4 1983009808
    %v104 = vunpack.c.0.s8 %v103
    %v105 = vperm.slane %v97, %v104
    %v106 = vrot.slane %v45, 4
    %v107 = vsel %vm70, %v106, %v39
    %v108 = vrot.slane %v39, 4
    %v109 = vsel %vm70, %v45, %v108
    %v111 = vunpack.c.l.s4 1983009808
    %v112 = vunpack.c.0.s8 %v111
    %v113 = vperm.slane %v107, %v112
    %v115 = vunpack.c.l.s4 1983009808
    %v116 = vunpack.c.0.s8 %v115
    %v117 = vperm.slane %v109, %v116
    %v118 = vrot.slane %v89, 4
    %v119 = vsel %vm70, %v118, %v77
    %v120 = vrot.slane %v77, 4
    %v121 = vsel %vm70, %v89, %v120
    %v123 = vunpack.c.l.s4 1934713408
    %v124 = vunpack.c.0.s8 %v123
    %v125 = vperm.slane %v119, %v124
    %v127 = vunpack.c.l.s4 1934713408
    %v128 = vunpack.c.0.s8 %v127
    %v129 = vperm.slane %v121, %v128
    %v130 = vrot.slane %v93, 4
    %v131 = vsel %vm70, %v130, %v81
    %v132 = vrot.slane %v81, 4
    %v133 = vsel %vm70, %v93, %v132
    %v135 = vunpack.c.l.s4 1934713408
    %v136 = vunpack.c.0.s8 %v135
    %v137 = vperm.slane %v131, %v136
    %v139 = vunpack.c.l.s4 1934713408
    %v140 = vunpack.c.0.s8 %v139
    %v141 = vperm.slane %v133, %v140
    %v142 = vrot.slane %v113, 4
    %v143 = vsel %vm70, %v142, %v101
    %v144 = vrot.slane %v101, 4
    %v145 = vsel %vm70, %v113, %v144
    %v147 = vunpack.c.l.s4 1934713408
    %v148 = vunpack.c.0.s8 %v147
    %v149 = vperm.slane %v143, %v148
    %v151 = vunpack.c.l.s4 1934713408
    %v152 = vunpack.c.0.s8 %v151
    %v153 = vperm.slane %v145, %v152
    %v154 = vrot.slane %v117, 4
    %v155 = vsel %vm70, %v154, %v105
    %v156 = vrot.slane %v105, 4
    %v157 = vsel %vm70, %v117, %v156
    %v159 = vunpack.c.l.s4 1934713408
    %v160 = vunpack.c.0.s8 %v159
    %v161 = vperm.slane %v155, %v160
    %v163 = vunpack.c.l.s4 1934713408
    %v164 = vunpack.c.0.s8 %v163
    %v165 = vperm.slane %v157, %v164
    %v166 = vrot.slane %v149, 4
    %v167 = vsel %vm70, %v166, %v125
    %v168 = vrot.slane %v125, 4
    %v169 = vsel %vm70, %v149, %v168
    %v170 = vrot.slane %v153, 4
    %v171 = vsel %vm70, %v170, %v129
    %v172 = vrot.slane %v129, 4
    %v173 = vsel %vm70, %v153, %v172
    %v174 = vrot.slane %v161, 4
    %v175 = vsel %vm70, %v174, %v137
    %v176 = vrot.slane %v137, 4
    %v177 = vsel %vm70, %v161, %v176
    %v178 = vrot.slane %v165, 4
    %v179 = vsel %vm70, %v178, %v141
    %v180 = vrot.slane %v141, 4
    %v181 = vsel %vm70, %v165, %v180
    %v182 = vrot.slane %v52, 4
    %v183 = vsel %vm70, %v182, %v24
    %v184 = vrot.slane %v24, 4
    %v185 = vsel %vm70, %v52, %v184
    %v187 = vunpack.c.l.s4 1983009808
    %v188 = vunpack.c.0.s8 %v187
    %v189 = vperm.slane %v183, %v188
    %v191 = vunpack.c.l.s4 1983009808
    %v192 = vunpack.c.0.s8 %v191
    %v193 = vperm.slane %v185, %v192
    %v194 = vrot.slane %v55, 4
    %v195 = vsel %vm70, %v194, %v49
    %v196 = vrot.slane %v49, 4
    %v197 = vsel %vm70, %v55, %v196
    %v199 = vunpack.c.l.s4 1983009808
    %v200 = vunpack.c.0.s8 %v199
    %v201 = vperm.slane %v195, %v200
    %v203 = vunpack.c.l.s4 1983009808
    %v204 = vunpack.c.0.s8 %v203
    %v205 = vperm.slane %v197, %v204
    %v206 = vrot.slane %v64, 4
    %v207 = vsel %vm70, %v206, %v58
    %v208 = vrot.slane %v58, 4
    %v209 = vsel %vm70, %v64, %v208
    %v211 = vunpack.c.l.s4 1983009808
    %v212 = vunpack.c.0.s8 %v211
    %v213 = vperm.slane %v207, %v212
    %v215 = vunpack.c.l.s4 1983009808
    %v216 = vunpack.c.0.s8 %v215
    %v217 = vperm.slane %v209, %v216
    %v218 = vrot.slane %v67, 4
    %v219 = vsel %vm70, %v218, %v61
    %v220 = vrot.slane %v61, 4
    %v221 = vsel %vm70, %v67, %v220
    %v223 = vunpack.c.l.s4 1983009808
    %v224 = vunpack.c.0.s8 %v223
    %v225 = vperm.slane %v219, %v224
    %v227 = vunpack.c.l.s4 1983009808
    %v228 = vunpack.c.0.s8 %v227
    %v229 = vperm.slane %v221, %v228
    %v230 = vrot.slane %v201, 4
    %v231 = vsel %vm70, %v230, %v189
    %v232 = vrot.slane %v189, 4
    %v233 = vsel %vm70, %v201, %v232
    %v235 = vunpack.c.l.s4 1934713408
    %v236 = vunpack.c.0.s8 %v235
    %v237 = vperm.slane %v231, %v236
    %v239 = vunpack.c.l.s4 1934713408
    %v240 = vunpack.c.0.s8 %v239
    %v241 = vperm.slane %v233, %v240
    %v242 = vrot.slane %v205, 4
    %v243 = vsel %vm70, %v242, %v193
    %v244 = vrot.slane %v193, 4
    %v245 = vsel %vm70, %v205, %v244
    %v247 = vunpack.c.l.s4 1934713408
    %v248 = vunpack.c.0.s8 %v247
    %v249 = vperm.slane %v243, %v248
    %v251 = vunpack.c.l.s4 1934713408
    %v252 = vunpack.c.0.s8 %v251
    %v253 = vperm.slane %v245, %v252
    %v254 = vrot.slane %v225, 4
    %v255 = vsel %vm70, %v254, %v213
    %v256 = vrot.slane %v213, 4
    %v257 = vsel %vm70, %v225, %v256
    %v259 = vunpack.c.l.s4 1934713408
    %v260 = vunpack.c.0.s8 %v259
    %v261 = vperm.slane %v255, %v260
    %v263 = vunpack.c.l.s4 1934713408
    %v264 = vunpack.c.0.s8 %v263
    %v265 = vperm.slane %v257, %v264
    %v266 = vrot.slane %v229, 4
    %v267 = vsel %vm70, %v266, %v217
    %v268 = vrot.slane %v217, 4
    %v269 = vsel %vm70, %v229, %v268
    %v271 = vunpack.c.l.s4 1934713408
    %v272 = vunpack.c.0.s8 %v271
    %v273 = vperm.slane %v267, %v272
    %v275 = vunpack.c.l.s4 1934713408
    %v276 = vunpack.c.0.s8 %v275
    %v277 = vperm.slane %v269, %v276
    %v278 = vrot.slane %v261, 4
    %v279 = vsel %vm70, %v278, %v237
    %v280 = vrot.slane %v237, 4
    %v281 = vsel %vm70, %v261, %v280
    %v282 = vrot.slane %v265, 4
    %v283 = vsel %vm70, %v282, %v241
    %v284 = vrot.slane %v241, 4
    %v285 = vsel %vm70, %v265, %v284
    %v286 = vrot.slane %v273, 4
    %v287 = vsel %vm70, %v286, %v249
    %v288 = vrot.slane %v249, 4
    %v289 = vsel %vm70, %v273, %v288
    %v290 = vrot.slane %v277, 4
    %v291 = vsel %vm70, %v290, %v253
    %v292 = vrot.slane %v253, 4
    %v293 = vsel %vm70, %v277, %v292
    %310 = vrot.lane.b32.xlu0 %v167, 6
    %v311 = vpop.permute.xlu0 %310
    %312 = vrot.lane.b32.xlu0 %v279, 6
    %v313 = vpop.permute.xlu0 %312
    %314 = vrot.lane.b32.xlu0 %v169, 6
    %v315 = vpop.permute.xlu0 %314
    %316 = vrot.lane.b32.xlu0 %v281, 6
    %v317 = vpop.permute.xlu0 %316
    %318 = vrot.lane.b32.xlu0 %v171, 6
    %v319 = vpop.permute.xlu0 %318
    %320 = vrot.lane.b32.xlu0 %v283, 6
    %v321 = vpop.permute.xlu0 %320
    %322 = vrot.lane.b32.xlu0 %v173, 6
    %v323 = vpop.permute.xlu0 %322
    %324 = vrot.lane.b32.xlu0 %v285, 6
    %v325 = vpop.permute.xlu0 %324
    %326 = vrot.lane.b32.xlu0 %v175, 6
    %v327 = vpop.permute.xlu0 %326
    %328 = vrot.lane.b32.xlu0 %v287, 6
    %v329 = vpop.permute.xlu0 %328
    %330 = vrot.lane.b32.xlu0 %v177, 6
    %v331 = vpop.permute.xlu0 %330
    %332 = vrot.lane.b32.xlu0 %v289, 6
    %v333 = vpop.permute.xlu0 %332
    %334 = vrot.lane.b32.xlu0 %v179, 6
    %v335 = vpop.permute.xlu0 %334
    %336 = vrot.lane.b32.xlu0 %v291, 6
    %v337 = vpop.permute.xlu0 %336
    %338 = vrot.lane.b32.xlu0 %v181, 6
    %v339 = vpop.permute.xlu0 %338
    %340 = vrot.lane.b32.xlu0 %v293, 6
    %v341 = vpop.permute.xlu0 %340
    %vm358 = vcmask 48128
    %v359 = vsel %vm358, 0.0, %v311
    %v360 = vsel %vm358, 0.0, %v313
    %v361 = vsel %vm358, 0.0, %v315
    %v362 = vsel %vm358, 0.0, %v317
    %v363 = vsel %vm358, 0.0, %v319
    %v364 = vsel %vm358, 0.0, %v321
    %v365 = vsel %vm358, 0.0, %v323
    %v366 = vsel %vm358, 0.0, %v325
    %v367 = vsel %vm358, 0.0, %v327
    %v368 = vsel %vm358, 0.0, %v329
    %v369 = vsel %vm358, 0.0, %v331
    %v370 = vsel %vm358, 0.0, %v333
    %v371 = vsel %vm358, 0.0, %v335
    %v372 = vsel %vm358, 0.0, %v337
    %v373 = vsel %vm358, 0.0, %v339
    %v374 = vsel %vm358, 0.0, %v341
    %vm375 = vcmask 179200
    %v376 = vsel %vm375, %v359, 0.0
    %v377 = vsel %vm375, %v360, 0.0
    %v378 = vsel %vm375, %v361, 0.0
    %v379 = vsel %vm375, %v362, 0.0
    %v380 = vsel %vm375, %v363, 0.0
    %v381 = vsel %vm375, %v364, 0.0
    %v382 = vsel %vm375, %v365, 0.0
    %v383 = vsel %vm375, %v366, 0.0
    %v384 = vsel %vm375, %v367, 0.0
    %v385 = vsel %vm375, %v368, 0.0
    %v386 = vsel %vm375, %v369, 0.0
    %v387 = vsel %vm375, %v370, 0.0
    %v388 = vsel %vm375, %v371, 0.0
    %v389 = vsel %vm375, %v372, 0.0
    %v390 = vsel %vm375, %v373, 0.0
    %v391 = vsel %vm375, %v374, 0.0
    %vm408 = vcmask 1045504
    %v409 = vrot.slane %v376, 2
    %v410 = vrot.slane %v377, 2
    %v411 = vsel %vm408, %v409, %v410
    %v412 = vrot.slane %v378, 2
    %v413 = vrot.slane %v379, 2
    %v414 = vsel %vm408, %v412, %v413
    %v415 = vrot.slane %v380, 2
    %v416 = vrot.slane %v381, 2
    %v417 = vsel %vm408, %v415, %v416
    %v418 = vrot.slane %v382, 2
    %v419 = vrot.slane %v383, 2
    %v420 = vsel %vm408, %v418, %v419
    %v421 = vrot.slane %v384, 2
    %v422 = vrot.slane %v385, 2
    %v423 = vsel %vm408, %v421, %v422
    %v424 = vrot.slane %v386, 2
    %v425 = vrot.slane %v387, 2
    %v426 = vsel %vm408, %v424, %v425
    %v427 = vrot.slane %v388, 2
    %v428 = vrot.slane %v389, 2
    %v429 = vsel %vm408, %v427, %v428
    %v430 = vrot.slane %v390, 2
    %v431 = vrot.slane %v391, 2
    %v432 = vsel %vm408, %v430, %v431
    %v457 = vsel %vm408, 0.0, %v409
    %v458 = vsel %vm408, 0.0, %v412
    %v459 = vsel %vm408, 0.0, %v415
    %v460 = vsel %vm408, 0.0, %v418
    %v461 = vsel %vm408, 0.0, %v421
    %v462 = vsel %vm408, 0.0, %v424
    %v463 = vsel %vm408, 0.0, %v427
    %v464 = vsel %vm408, 0.0, %v430
    %v465 = vsel %vm408, %v410, 0.0
    %v466 = vsel %vm408, %v413, 0.0
    %v467 = vsel %vm408, %v416, 0.0
    %v468 = vsel %vm408, %v419, 0.0
    %v469 = vsel %vm408, %v422, 0.0
    %v470 = vsel %vm408, %v425, 0.0
    %v471 = vsel %vm408, %v428, 0.0
    %v472 = vsel %vm408, %v431, 0.0
    %v473 = vrot.slane %v459, 4
    %v474 = vsel %vm70, %v473, %v457
    %v475 = vrot.slane %v457, 4
    %v476 = vsel %vm70, %v459, %v475
    %v478 = vunpack.c.l.s4 1983009808
    %v479 = vunpack.c.0.s8 %v478
    %v480 = vperm.slane %v474, %v479
    %v482 = vunpack.c.l.s4 1983009808
    %v483 = vunpack.c.0.s8 %v482
    %v484 = vperm.slane %v476, %v483
    %v485 = vrot.slane %v460, 4
    %v486 = vsel %vm70, %v485, %v458
    %v487 = vrot.slane %v458, 4
    %v488 = vsel %vm70, %v460, %v487
    %v490 = vunpack.c.l.s4 1983009808
    %v491 = vunpack.c.0.s8 %v490
    %v492 = vperm.slane %v486, %v491
    %v494 = vunpack.c.l.s4 1983009808
    %v495 = vunpack.c.0.s8 %v494
    %v496 = vperm.slane %v488, %v495
    %v497 = vrot.slane %v463, 4
    %v498 = vsel %vm70, %v497, %v461
    %v499 = vrot.slane %v461, 4
    %v500 = vsel %vm70, %v463, %v499
    %v502 = vunpack.c.l.s4 1983009808
    %v503 = vunpack.c.0.s8 %v502
    %v504 = vperm.slane %v498, %v503
    %v506 = vunpack.c.l.s4 1983009808
    %v507 = vunpack.c.0.s8 %v506
    %v508 = vperm.slane %v500, %v507
    %v509 = vrot.slane %v464, 4
    %v510 = vsel %vm70, %v509, %v462
    %v511 = vrot.slane %v462, 4
    %v512 = vsel %vm70, %v464, %v511
    %v514 = vunpack.c.l.s4 1983009808
    %v515 = vunpack.c.0.s8 %v514
    %v516 = vperm.slane %v510, %v515
    %v518 = vunpack.c.l.s4 1983009808
    %v519 = vunpack.c.0.s8 %v518
    %v520 = vperm.slane %v512, %v519
    %v521 = vrot.slane %v492, 4
    %v522 = vsel %vm70, %v521, %v480
    %v523 = vrot.slane %v480, 4
    %v524 = vsel %vm70, %v492, %v523
    %v526 = vunpack.c.l.s4 1934713408
    %v527 = vunpack.c.0.s8 %v526
    %v528 = vperm.slane %v522, %v527
    %v530 = vunpack.c.l.s4 1934713408
    %v531 = vunpack.c.0.s8 %v530
    %v532 = vperm.slane %v524, %v531
    %v533 = vrot.slane %v496, 4
    %v534 = vsel %vm70, %v533, %v484
    %v535 = vrot.slane %v484, 4
    %v536 = vsel %vm70, %v496, %v535
    %v538 = vunpack.c.l.s4 1934713408
    %v539 = vunpack.c.0.s8 %v538
    %v540 = vperm.slane %v534, %v539
    %v542 = vunpack.c.l.s4 1934713408
    %v543 = vunpack.c.0.s8 %v542
    %v544 = vperm.slane %v536, %v543
    %v545 = vrot.slane %v516, 4
    %v546 = vsel %vm70, %v545, %v504
    %v547 = vrot.slane %v504, 4
    %v548 = vsel %vm70, %v516, %v547
    %v550 = vunpack.c.l.s4 1934713408
    %v551 = vunpack.c.0.s8 %v550
    %v552 = vperm.slane %v546, %v551
    %v554 = vunpack.c.l.s4 1934713408
    %v555 = vunpack.c.0.s8 %v554
    %v556 = vperm.slane %v548, %v555
    %v557 = vrot.slane %v520, 4
    %v558 = vsel %vm70, %v557, %v508
    %v559 = vrot.slane %v508, 4
    %v560 = vsel %vm70, %v520, %v559
    %v562 = vunpack.c.l.s4 1934713408
    %v563 = vunpack.c.0.s8 %v562
    %v564 = vperm.slane %v558, %v563
    %v566 = vunpack.c.l.s4 1934713408
    %v567 = vunpack.c.0.s8 %v566
    %v568 = vperm.slane %v560, %v567
    %v569 = vrot.slane %v552, 4
    %v570 = vsel %vm70, %v569, %v528
    %v571 = vrot.slane %v528, 4
    %v572 = vsel %vm70, %v552, %v571
    %v573 = vrot.slane %v556, 4
    %v574 = vsel %vm70, %v573, %v532
    %v575 = vrot.slane %v532, 4
    %v576 = vsel %vm70, %v556, %v575
    %v577 = vrot.slane %v564, 4
    %v578 = vsel %vm70, %v577, %v540
    %v579 = vrot.slane %v540, 4
    %v580 = vsel %vm70, %v564, %v579
    %v581 = vrot.slane %v568, 4
    %v582 = vsel %vm70, %v581, %v544
    %v583 = vrot.slane %v544, 4
    %v584 = vsel %vm70, %v568, %v583
    %v585 = vrot.slane %v417, 4
    %v586 = vsel %vm70, %v585, %v411
    %v587 = vrot.slane %v411, 4
    %v588 = vsel %vm70, %v417, %v587
    %v590 = vunpack.c.l.s4 1983009808
    %v591 = vunpack.c.0.s8 %v590
    %v592 = vperm.slane %v586, %v591
    %v594 = vunpack.c.l.s4 1983009808
    %v595 = vunpack.c.0.s8 %v594
    %v596 = vperm.slane %v588, %v595
    %v597 = vrot.slane %v420, 4
    %v598 = vsel %vm70, %v597, %v414
    %v599 = vrot.slane %v414, 4
    %v600 = vsel %vm70, %v420, %v599
    %v602 = vunpack.c.l.s4 1983009808
    %v603 = vunpack.c.0.s8 %v602
    %v604 = vperm.slane %v598, %v603
    %v606 = vunpack.c.l.s4 1983009808
    %v607 = vunpack.c.0.s8 %v606
    %v608 = vperm.slane %v600, %v607
    %v609 = vrot.slane %v429, 4
    %v610 = vsel %vm70, %v609, %v423
    %v611 = vrot.slane %v423, 4
    %v612 = vsel %vm70, %v429, %v611
    %v614 = vunpack.c.l.s4 1983009808
    %v615 = vunpack.c.0.s8 %v614
    %v616 = vperm.slane %v610, %v615
    %v618 = vunpack.c.l.s4 1983009808
    %v619 = vunpack.c.0.s8 %v618
    %v620 = vperm.slane %v612, %v619
    %v621 = vrot.slane %v432, 4
    %v622 = vsel %vm70, %v621, %v426
    %v623 = vrot.slane %v426, 4
    %v624 = vsel %vm70, %v432, %v623
    %v626 = vunpack.c.l.s4 1983009808
    %v627 = vunpack.c.0.s8 %v626
    %v628 = vperm.slane %v622, %v627
    %v630 = vunpack.c.l.s4 1983009808
    %v631 = vunpack.c.0.s8 %v630
    %v632 = vperm.slane %v624, %v631
    %v633 = vrot.slane %v604, 4
    %v634 = vsel %vm70, %v633, %v592
    %v635 = vrot.slane %v592, 4
    %v636 = vsel %vm70, %v604, %v635
    %v638 = vunpack.c.l.s4 1934713408
    %v639 = vunpack.c.0.s8 %v638
    %v640 = vperm.slane %v634, %v639
    %v642 = vunpack.c.l.s4 1934713408
    %v643 = vunpack.c.0.s8 %v642
    %v644 = vperm.slane %v636, %v643
    %v645 = vrot.slane %v608, 4
    %v646 = vsel %vm70, %v645, %v596
    %v647 = vrot.slane %v596, 4
    %v648 = vsel %vm70, %v608, %v647
    %v650 = vunpack.c.l.s4 1934713408
    %v651 = vunpack.c.0.s8 %v650
    %v652 = vperm.slane %v646, %v651
    %v654 = vunpack.c.l.s4 1934713408
    %v655 = vunpack.c.0.s8 %v654
    %v656 = vperm.slane %v648, %v655
    %v657 = vrot.slane %v628, 4
    %v658 = vsel %vm70, %v657, %v616
    %v659 = vrot.slane %v616, 4
    %v660 = vsel %vm70, %v628, %v659
    %v662 = vunpack.c.l.s4 1934713408
    %v663 = vunpack.c.0.s8 %v662
    %v664 = vperm.slane %v658, %v663
    %v666 = vunpack.c.l.s4 1934713408
    %v667 = vunpack.c.0.s8 %v666
    %v668 = vperm.slane %v660, %v667
    %v669 = vrot.slane %v632, 4
    %v670 = vsel %vm70, %v669, %v620
    %v671 = vrot.slane %v620, 4
    %v672 = vsel %vm70, %v632, %v671
    %v674 = vunpack.c.l.s4 1934713408
    %v675 = vunpack.c.0.s8 %v674
    %v676 = vperm.slane %v670, %v675
    %v678 = vunpack.c.l.s4 1934713408
    %v679 = vunpack.c.0.s8 %v678
    %v680 = vperm.slane %v672, %v679
    %v681 = vrot.slane %v664, 4
    %v682 = vsel %vm70, %v681, %v640
    %v683 = vrot.slane %v640, 4
    %v684 = vsel %vm70, %v664, %v683
    %v685 = vrot.slane %v668, 4
    %v686 = vsel %vm70, %v685, %v644
    %v687 = vrot.slane %v644, 4
    %v688 = vsel %vm70, %v668, %v687
    %v689 = vrot.slane %v676, 4
    %v690 = vsel %vm70, %v689, %v652
    %v691 = vrot.slane %v652, 4
    %v692 = vsel %vm70, %v676, %v691
    %v693 = vrot.slane %v680, 4
    %v694 = vsel %vm70, %v693, %v656
    %v695 = vrot.slane %v656, 4
    %v696 = vsel %vm70, %v680, %v695
    %v697 = vrot.slane %v467, 4
    %v698 = vsel %vm70, %v697, %v465
    %v699 = vrot.slane %v465, 4
    %v700 = vsel %vm70, %v467, %v699
    %v702 = vunpack.c.l.s4 1983009808
    %v703 = vunpack.c.0.s8 %v702
    %v704 = vperm.slane %v698, %v703
    %v706 = vunpack.c.l.s4 1983009808
    %v707 = vunpack.c.0.s8 %v706
    %v708 = vperm.slane %v700, %v707
    %v709 = vrot.slane %v468, 4
    %v710 = vsel %vm70, %v709, %v466
    %v711 = vrot.slane %v466, 4
    %v712 = vsel %vm70, %v468, %v711
    %v714 = vunpack.c.l.s4 1983009808
    %v715 = vunpack.c.0.s8 %v714
    %v716 = vperm.slane %v710, %v715
    %v718 = vunpack.c.l.s4 1983009808
    %v719 = vunpack.c.0.s8 %v718
    %v720 = vperm.slane %v712, %v719
    %v721 = vrot.slane %v471, 4
    %v722 = vsel %vm70, %v721, %v469
    %v723 = vrot.slane %v469, 4
    %v724 = vsel %vm70, %v471, %v723
    %v726 = vunpack.c.l.s4 1983009808
    %v727 = vunpack.c.0.s8 %v726
    %v728 = vperm.slane %v722, %v727
    %v730 = vunpack.c.l.s4 1983009808
    %v731 = vunpack.c.0.s8 %v730
    %v732 = vperm.slane %v724, %v731
    %v733 = vrot.slane %v472, 4
    %v734 = vsel %vm70, %v733, %v470
    %v735 = vrot.slane %v470, 4
    %v736 = vsel %vm70, %v472, %v735
    %v738 = vunpack.c.l.s4 1983009808
    %v739 = vunpack.c.0.s8 %v738
    %v740 = vperm.slane %v734, %v739
    %v742 = vunpack.c.l.s4 1983009808
    %v743 = vunpack.c.0.s8 %v742
    %v744 = vperm.slane %v736, %v743
    %v745 = vrot.slane %v716, 4
    %v746 = vsel %vm70, %v745, %v704
    %v747 = vrot.slane %v704, 4
    %v748 = vsel %vm70, %v716, %v747
    %v750 = vunpack.c.l.s4 1934713408
    %v751 = vunpack.c.0.s8 %v750
    %v752 = vperm.slane %v746, %v751
    %v754 = vunpack.c.l.s4 1934713408
    %v755 = vunpack.c.0.s8 %v754
    %v756 = vperm.slane %v748, %v755
    %v757 = vrot.slane %v720, 4
    %v758 = vsel %vm70, %v757, %v708
    %v759 = vrot.slane %v708, 4
    %v760 = vsel %vm70, %v720, %v759
    %v762 = vunpack.c.l.s4 1934713408
    %v763 = vunpack.c.0.s8 %v762
    %v764 = vperm.slane %v758, %v763
    %v766 = vunpack.c.l.s4 1934713408
    %v767 = vunpack.c.0.s8 %v766
    %v768 = vperm.slane %v760, %v767
    %v769 = vrot.slane %v740, 4
    %v770 = vsel %vm70, %v769, %v728
    %v771 = vrot.slane %v728, 4
    %v772 = vsel %vm70, %v740, %v771
    %v774 = vunpack.c.l.s4 1934713408
    %v775 = vunpack.c.0.s8 %v774
    %v776 = vperm.slane %v770, %v775
    %v778 = vunpack.c.l.s4 1934713408
    %v779 = vunpack.c.0.s8 %v778
    %v780 = vperm.slane %v772, %v779
    %v781 = vrot.slane %v744, 4
    %v782 = vsel %vm70, %v781, %v732
    %v783 = vrot.slane %v732, 4
    %v784 = vsel %vm70, %v744, %v783
    %v786 = vunpack.c.l.s4 1934713408
    %v787 = vunpack.c.0.s8 %v786
    %v788 = vperm.slane %v782, %v787
    %v790 = vunpack.c.l.s4 1934713408
    %v791 = vunpack.c.0.s8 %v790
    %v792 = vperm.slane %v784, %v791
    %v793 = vrot.slane %v776, 4
    %v794 = vsel %vm70, %v793, %v752
    %v795 = vrot.slane %v752, 4
    %v796 = vsel %vm70, %v776, %v795
    %v797 = vrot.slane %v780, 4
    %v798 = vsel %vm70, %v797, %v756
    %v799 = vrot.slane %v756, 4
    %v800 = vsel %vm70, %v780, %v799
    %v801 = vrot.slane %v788, 4
    %v802 = vsel %vm70, %v801, %v764
    %v803 = vrot.slane %v764, 4
    %v804 = vsel %vm70, %v788, %v803
    %v805 = vrot.slane %v792, 4
    %v806 = vsel %vm70, %v805, %v768
    %v807 = vrot.slane %v768, 4
    %v808 = vsel %vm70, %v792, %v807
    %v809 = vsel %vm70, 0.0, 0.0
    %v811 = vunpack.c.l.s4 1983009808
    %v812 = vunpack.c.0.s8 %v811
    %v813 = vperm.slane %v809, %v812
    %v814 = vrot.slane %v813, 4
    %v815 = vsel %vm70, %v814, %v813
    %v816 = vsel %vm70, %v813, %v814
    %v818 = vunpack.c.l.s4 1934713408
    %v819 = vunpack.c.0.s8 %v818
    %v820 = vperm.slane %v815, %v819
    %v822 = vunpack.c.l.s4 1934713408
    %v823 = vunpack.c.0.s8 %v822
    %v824 = vperm.slane %v816, %v823
    %v825 = vrot.slane %v820, 4
    %v826 = vsel %vm70, %v825, %v820
    %v827 = vsel %vm70, %v820, %v825
    %v828 = vrot.slane %v824, 4
    %v829 = vsel %vm70, %v828, %v824
    %v830 = vsel %vm70, %v824, %v828
    %832 = vrot.lane.b32.xlu0 %v572, 28
    %v833 = vpop.permute.xlu0 %832
    %836 = vrot.lane.b32.xlu0 %v574, 56
    %v837 = vpop.permute.xlu0 %836
    %840 = vrot.lane.b32.xlu0 %v576, 84
    %v841 = vpop.permute.xlu0 %840
    %844 = vrot.lane.b32.xlu0 %v578, 112
    %v845 = vpop.permute.xlu0 %844
    %848 = vrot.lane.b32.xlu0 %v580, 12
    %v849 = vpop.permute.xlu0 %848
    %852 = vrot.lane.b32.xlu0 %v582, 40
    %v853 = vpop.permute.xlu0 %852
    %856 = vrot.lane.b32.xlu0 %v584, 68
    %v857 = vpop.permute.xlu0 %856
    %860 = vrot.lane.b32.xlu0 %v682, 96
    %v861 = vpop.permute.xlu0 %860
    %864 = vrot.lane.b32.xlu0 %v684, 124
    %v865 = vpop.permute.xlu0 %864
    %868 = vrot.lane.b32.xlu0 %v686, 24
    %v869 = vpop.permute.xlu0 %868
    %872 = vrot.lane.b32.xlu0 %v688, 52
    %v873 = vpop.permute.xlu0 %872
    %876 = vrot.lane.b32.xlu0 %v690, 80
    %v877 = vpop.permute.xlu0 %876
    %880 = vrot.lane.b32.xlu0 %v692, 108
    %v881 = vpop.permute.xlu0 %880
    %884 = vrot.lane.b32.xlu0 %v694, 8
    %v885 = vpop.permute.xlu0 %884
    %888 = vrot.lane.b32.xlu0 %v696, 36
    %v889 = vpop.permute.xlu0 %888
    %892 = vrot.lane.b32.xlu0 %v794, 64
    %v893 = vpop.permute.xlu0 %892
    %896 = vrot.lane.b32.xlu0 %v796, 92
    %v897 = vpop.permute.xlu0 %896
    %900 = vrot.lane.b32.xlu0 %v798, 120
    %v901 = vpop.permute.xlu0 %900
    %904 = vrot.lane.b32.xlu0 %v800, 20
    %v905 = vpop.permute.xlu0 %904
    %908 = vrot.lane.b32.xlu0 %v802, 48
    %v909 = vpop.permute.xlu0 %908
    %912 = vrot.lane.b32.xlu0 %v804, 76
    %v913 = vpop.permute.xlu0 %912
    %916 = vrot.lane.b32.xlu0 %v806, 104
    %v917 = vpop.permute.xlu0 %916
    %920 = vrot.lane.b32.xlu0 %v808, 4
    %v921 = vpop.permute.xlu0 %920
    %924 = vrot.lane.b32.xlu0 %v826, 32
    %v925 = vpop.permute.xlu0 %924
    %928 = vrot.lane.b32.xlu0 %v827, 60
    %v929 = vpop.permute.xlu0 %928
    %932 = vrot.lane.b32.xlu0 %v829, 88
    %v933 = vpop.permute.xlu0 %932
    %936 = vrot.lane.b32.xlu0 %v830, 116
    %v937 = vpop.permute.xlu0 %936
    %vm939 = vcmask 228352
    %v940 = vsel %vm939, %v570, %v833
    %vm941 = vcmask 457728
    %v942 = vsel %vm941, %v940, %v837
    %vm943 = vcmask 687104
    %v944 = vsel %vm943, %v942, %v841
    %vm945 = vcmask 916480
    %v946 = vsel %vm945, %v944, %v845
    %vm947 = vcmask 97280
    %v948 = vsel %vm947, %v845, %v849
    %vm949 = vcmask 326656
    %v950 = vsel %vm949, %v948, %v853
    %vm951 = vcmask 556032
    %v952 = vsel %vm951, %v950, %v857
    %vm953 = vcmask 785408
    %v954 = vsel %vm953, %v952, %v861
    %vm955 = vcmask 1014784
    %v956 = vsel %vm955, %v954, %v865
    %vm957 = vcmask 195584
    %v958 = vsel %vm957, %v865, %v869
    %vm959 = vcmask 424960
    %v960 = vsel %vm959, %v958, %v873
    %vm961 = vcmask 654336
    %v962 = vsel %vm961, %v960, %v877
    %vm963 = vcmask 883712
    %v964 = vsel %vm963, %v962, %v881
    %vm965 = vcmask 64512
    %v966 = vsel %vm965, %v881, %v885
    %vm967 = vcmask 293888
    %v968 = vsel %vm967, %v966, %v889
    %vm969 = vcmask 523264
    %v970 = vsel %vm969, %v968, %v893
    %vm971 = vcmask 752640
    %v972 = vsel %vm971, %v970, %v897
    %vm973 = vcmask 982016
    %v974 = vsel %vm973, %v972, %v901
    %vm975 = vcmask 162816
    %v976 = vsel %vm975, %v901, %v905
    %vm977 = vcmask 392192
    %v978 = vsel %vm977, %v976, %v909
    %vm979 = vcmask 621568
    %v980 = vsel %vm979, %v978, %v913
    %vm981 = vcmask 850944
    %v982 = vsel %vm981, %v980, %v917
    %vm983 = vcmask 31744
    %v984 = vsel %vm983, %v917, %v921
    %vm985 = vcmask 261120
    %v986 = vsel %vm985, %v984, %v925
    %vm987 = vcmask 490496
    %v988 = vsel %vm987, %v986, %v929
    %vm989 = vcmask 719872
    %v990 = vsel %vm989, %v988, %v933
    %vm991 = vcmask 949248
    %v992 = vsel %vm991, %v990, %v937
    %993 = vst [vmem:[#allocation5] sm:$0xff] %v946
    %994 = vst [vmem:[#allocation5 + $0x8] sm:$0xff] %v956
    %995 = vst [vmem:[#allocation5 + $0x10] sm:$0xff] %v964
    %996 = vst [vmem:[#allocation5 + $0x18] sm:$0xff] %v974
    %997 = vst [vmem:[#allocation5 + $0x20] sm:$0xff] %v982
    %998 = vst [vmem:[#allocation5 + $0x28] sm:$0xff] %v992
    %vm999 = vcmask 130048
    %1000 = vst.msk [vmem:[#allocation5 + $0x30] sm:$0xff] %vm999, %v937
    // Predicated region
    $region10: #{tpu_custom_call.1} parent=1 // pred_check
      _
    $region11: #{tpu_custom_call.1} parent=1 // pred_check_branch
      %1002 = sbr.rel (0) target = $region13
    $region12: #{tpu_custom_call.1} parent=1 // pred_region
      %1004 = vsyncadd [#allocation4], 0
      %s1006 = sshll.u32 [#allocation5], 4
      %s1007 = int_to_ptr.vmem [resolvable:$true] %s1006
      %s1008 = sshll.u32 %s1, 4
      %s1009 = int_to_ptr.hbm [resolvable:$true] %s1008
      %1011 = dma.vmem_to_hbm [thread:$0]  %s1007, 896, %s1009, [#allocation4]
    $region13: #{tpu_custom_call.1} parent=1 // pred_fallthru
      _
    // Predicated region
    $region14: #{tpu_custom_call.1} parent=1 // pred_check
      _
    $region15: #{tpu_custom_call.1} parent=1 // pred_check_branch
      %1013 = sbr.rel (0) target = $region17
    $region16: #{tpu_custom_call.1} parent=1 // pred_region
      %1015 = dma.done [#allocation4], 896
    $region17: #{tpu_custom_call.1} parent=1 // pred_fallthru
      _
    %1016 = vsyncpa [#allocation3], 1
    %1017 = vsyncpa [#allocation4], 1

</llo_original>
